<compile_context>
chip_gen: v7x
topology: tpu7x:2x2x1
jax: 0.10.0
libtpu: 0.0.40
codegen_flags: <defaults>
</compile_context>

<pallas_src>
import functools
from math import sqrt

import jax
import jax.numpy as jnp
from jax import lax
from jax.experimental import pallas as pl
from jax.experimental.pallas import tpu as pltpu

LANE = 128          # TPU lane width — channel padding target
NEG_SLOPE = 0.2     # LeakyReLU slope used throughout the Critic


def _round_up(x, m):
    return ((x + m - 1) // m) * m


# ---------------------------------------------------------------------------
# Weight-scaled conv2d (stride 1) + fused bias / LeakyReLU
# ---------------------------------------------------------------------------
def _wsconv_kernel(x_ref, w_ref, b_ref, o_ref, acc_ref, *, K, HO, WO, neg_slope):
    """One (batch image, Cout tile) grid step.

    x_ref  : (1, HO+K-1, WO+K-1, Cp_in)  spatially padded NHWC input block
    w_ref  : (K, K, Cp_in, TCO)          HWIO weights (scale already folded in)
    b_ref  : (1, TCO)                    bias (f32)
    o_ref  : (1, HO, WO, TCO)            output block
    acc_ref: (HO*WO, TCO) f32            VMEM scratch accumulator
    """
    cin = x_ref.shape[-1]
    acc_ref[...] = jnp.zeros_like(acc_ref)
    for kh in range(K):
        for kw in range(K):
            patch = x_ref[0, kh:kh + HO, kw:kw + WO, :].reshape(HO * WO, cin)
            acc_ref[...] += jnp.dot(patch, w_ref[kh, kw],
                                    preferred_element_type=jnp.float32)
    y = acc_ref[...] + b_ref[...].astype(jnp.float32)
    if neg_slope is not None:
        y = jnp.where(y >= 0.0, y, y * neg_slope)
    o_ref[0] = y.reshape(HO, WO, -1).astype(o_ref.dtype)


def ws_conv2d(x, w_oihw, b, *, padding, lrelu=False, cout_tile=LANE):
    """WeightScaledConv2d.forward on a channel-padded NHWC activation.

    x       : (N, H, W, Cp_in) with Cp_in % 128 == 0; channels >= real Cin are 0.
    w_oihw  : (Cout, Cin, K, K) unscaled weights (PyTorch layout).
    Returns : (N, HO, WO, Cp_out) NHWC, Cp_out = round_up(Cout, 128); the padded
              output channels are exactly zero, so layers can be chained.
    """
    N, H, W, Cp_in = x.shape
    Cout, Cin, K, _ = w_oihw.shape
    assert Cp_in % LANE == 0 and Cin <= Cp_in
    scale = sqrt(2.0 / (Cin * K * K))                   # uses the *real* Cin
    Cp_out = _round_up(Cout, LANE)
    TCO = min(cout_tile, Cp_out)

    # Wrapper glue (single XLA ops): fold scale into weights, transpose
    # OIHW->HWIO, zero-pad channels to lane multiples, spatially pad input.
    w = jnp.transpose(w_oihw, (2, 3, 1, 0)).astype(x.dtype) * scale
    w = jnp.pad(w, ((0, 0), (0, 0), (0, Cp_in - Cin), (0, Cp_out - Cout)))
    bp = jnp.pad(b.astype(jnp.float32), (0, Cp_out - Cout)).reshape(1, Cp_out)
    xp = (jnp.pad(x, ((0, 0), (padding, padding), (padding, padding), (0, 0)))
          if padding else x)

    HP, WP = H + 2 * padding, W + 2 * padding
    HO, WO = HP - K + 1, WP - K + 1

    flops = 2 * N * HO * WO * Cp_in * Cp_out * K * K
    bytes_accessed = (xp.size + w.size + N * HO * WO * Cp_out) * xp.dtype.itemsize \
        + bp.size * 4

    kernel = functools.partial(
        _wsconv_kernel, K=K, HO=HO, WO=WO,
        neg_slope=NEG_SLOPE if lrelu else None)

    return pl.pallas_call(
        kernel,
        out_shape=jax.ShapeDtypeStruct((N, HO, WO, Cp_out), x.dtype),
        grid_spec=pltpu.PrefetchScalarGridSpec(
            num_scalar_prefetch=0,
            grid=(N, Cp_out // TCO),
            in_specs=[
                pl.BlockSpec((1, HP, WP, Cp_in), lambda n, j: (n, 0, 0, 0)),
                pl.BlockSpec((K, K, Cp_in, TCO), lambda n, j: (0, 0, 0, j)),
                pl.BlockSpec((1, TCO), lambda n, j: (0, j)),
            ],
            out_specs=pl.BlockSpec((1, HO, WO, TCO), lambda n, j: (n, 0, 0, j)),
            scratch_shapes=[pltpu.VMEM((HO * WO, TCO), jnp.float32)],
        ),
        compiler_params=pltpu.CompilerParams(
            dimension_semantics=("parallel", "parallel")),
        cost_estimate=pl.CostEstimate(
            flops=flops, transcendentals=0, bytes_accessed=bytes_accessed),
    )(xp, w, bp)


# ---------------------------------------------------------------------------
# AvgPool2d(2, 2)
# ---------------------------------------------------------------------------
def _avgpool2_kernel(x_ref, o_ref):
    x = x_ref[0].astype(jnp.float32)                 # (H, W, C)
    H, W, C = x.shape
    x = x.reshape(H // 2, 2, W, C)
    s = x[:, 0] + x[:, 1]                            # (H//2, W, C)
    s = s.reshape(H // 2, W // 2, 2, C)
    o_ref[0] = ((s[:, :, 0, :] + s[:, :, 1, :]) * 0.25).astype(o_ref.dtype)


def avg_pool2(x):
    N, H, W, C = x.shape
    return pl.pallas_call(
        _avgpool2_kernel,
        out_shape=jax.ShapeDtypeStruct((N, H // 2, W // 2, C), x.dtype),
        grid_spec=pltpu.PrefetchScalarGridSpec(
            num_scalar_prefetch=0,
            grid=(N,),
            in_specs=[pl.BlockSpec((1, H, W, C), lambda n: (n, 0, 0, 0))],
            out_specs=pl.BlockSpec((1, H // 2, W // 2, C), lambda n: (n, 0, 0, 0)),
        ),
        compiler_params=pltpu.CompilerParams(dimension_semantics=("parallel",)),
    )(x)


# ---------------------------------------------------------------------------
# minibatch_std: append one channel holding mean-over-everything of the
# unbiased per-element std across the batch (torch.std(dim=0).mean()).
# Tensors at this stage are tiny (4x4 spatial), so a single-block kernel is
# appropriate here.
# ---------------------------------------------------------------------------
def _mbstd_kernel(x_ref, o_ref, *, c_real):
    x = x_ref[...].astype(jnp.float32)               # (N, H, W, Cp)
    n, h, w, _ = x.shape
    mean = jnp.mean(x, axis=0, keepdims=True)
    var = jnp.sum((x - mean) ** 2, axis=0) / (n - 1)  # unbiased, as torch.std
    # Padded channels are exactly zero everywhere -> contribute 0 to the sum.
    stat = jnp.sum(jnp.sqrt(var)) / (h * w * c_real)
    cidx = lax.broadcasted_iota(jnp.int32, x.shape, 3)
    o_ref[...] = jnp.where(cidx == c_real, stat, x).astype(o_ref.dtype)


def minibatch_std(x, c_real):
    N, H, W, Cp = x.shape
    if c_real + 1 > Cp:                               # need a lane for the stat
        x = jnp.pad(x, ((0, 0), (0, 0), (0, 0), (0, LANE)))
        Cp += LANE
    out = pl.pallas_call(
        functools.partial(_mbstd_kernel, c_real=c_real),
        out_shape=jax.ShapeDtypeStruct((N, H, W, Cp), x.dtype),
        in_specs=[pl.BlockSpec(memory_space=pltpu.MemorySpace.VMEM)],
        out_specs=pl.BlockSpec(memory_space=pltpu.MemorySpace.VMEM),
    )(x)
    return out, c_real + 1


# ---------------------------------------------------------------------------
# Critic parameters (matches the PyTorch init: W ~ N(0,1), bias = 0)
# ---------------------------------------------------------------------------
def _conv_init(key, cin, cout, k):
    return {"w": jax.random.normal(key, (cout, cin, k, k), dtype=jnp.float32),
            "b": jnp.zeros((cout,), dtype=jnp.float32)}


def init_critic(key, in_channels, img_channels=3,
                factors=(1, 1, 1, 1, 1 / 2, 1 / 4, 1 / 8, 1 / 16, 1 / 32)):
    prog_blocks, rgb_layers = [], []
    for i in range(len(factors) - 1, 0, -1):
        cin = int(in_channels * factors[i])
        cout = int(in_channels * factors[i - 1])
        key, k1, k2, k3 = jax.random.split(key, 4)
        prog_blocks.append({"conv1": _conv_init(k1, cin, cout, 3),
                            "conv2": _conv_init(k2, cout, cout, 3)})
        rgb_layers.append(_conv_init(k3, img_channels, cin, 1))
    key, kr = jax.random.split(key)
    rgb_layers.append(_conv_init(kr, img_channels, in_channels, 1))  # from_rgb
    key, k1, k2, k3 = jax.random.split(key, 4)
    final_block = [_conv_init(k1, in_channels + 1, in_channels, 3),
                   _conv_init(k2, in_channels, in_channels, 4),
                   _conv_init(k3, in_channels, 1, 1)]
    return {"prog_blocks": prog_blocks, "rgb_layers": rgb_layers,
            "final_block": final_block}


# ---------------------------------------------------------------------------
# Critic forward (Pallas path). NCHW in, (N, 1) out — matches the PyTorch
# module. Activations stay NHWC / channel-padded between the kernels.
# ---------------------------------------------------------------------------
def _to_nhwc_padded(x_nchw):
    N, C, H, W = x_nchw.shape
    x = jnp.transpose(x_nchw, (0, 2, 3, 1))
    x = jnp.pad(x, ((0, 0), (0, 0), (0, 0), (0, _round_up(C, LANE) - C)))
    return x


def _conv_block(block, x):
    # ConvBlock with use_pexelnorm=False: two 3x3 WS-convs, each + LeakyReLU.
    x = ws_conv2d(x, block["conv1"]["w"], block["conv1"]["b"], padding=1, lrelu=True)
    x = ws_conv2d(x, block["conv2"]["w"], block["conv2"]["b"], padding=1, lrelu=True)
    return x


def critic_forward(params, x_nchw, alpha, steps):
    n_blocks = len(params["prog_blocks"])
    cur_step = n_blocks - steps

    x = _to_nhwc_padded(x_nchw)
    rgb = params["rgb_layers"][cur_step]
    out = ws_conv2d(x, rgb["w"], rgb["b"], padding=0, lrelu=True)
    c_real = rgb["w"].shape[0]

    if steps > 0:
        rgb_next = params["rgb_layers"][cur_step + 1]
        downscaled = ws_conv2d(avg_pool2(x), rgb_next["w"], rgb_next["b"],
                               padding=0, lrelu=True)
        out = avg_pool2(_conv_block(params["prog_blocks"][cur_step], out))
        # fade_in: trivial scalar blend — plain JAX elementwise glue.
        out = alpha * out + (1.0 - alpha) * downscaled
        c_real = params["prog_blocks"][cur_step]["conv2"]["w"].shape[0]
        for step in range(cur_step + 1, n_blocks):
            out = avg_pool2(_conv_block(params["prog_blocks"][step], out))
            c_real = params["prog_blocks"][step]["conv2"]["w"].shape[0]

    out, c_real = minibatch_std(out, c_real)
    f1, f2, f3 = params["final_block"]
    out = ws_conv2d(out, f1["w"], f1["b"], padding=1, lrelu=True)   # 3x3, pad 1
    out = ws_conv2d(out, f2["w"], f2["b"], padding=0, lrelu=True)   # 4x4, pad 0
    out = ws_conv2d(out, f3["w"], f3["b"], padding=0, lrelu=False)  # 1x1 -> 1 ch
    return out[:, 0, 0, :1]                                          # (N, 1)


# ---------------------------------------------------------------------------
# Pure-JAX reference (NCHW, lax.conv) for correctness checking
# ---------------------------------------------------------------------------
def _leaky_ref(x):
    return jnp.where(x >= 0.0, x, x * NEG_SLOPE)


def _ws_conv_ref(p, x, padding):
    cout, cin, k, _ = p["w"].shape
    scale = sqrt(2.0 / (cin * k * k))
    y = lax.conv_general_dilated(
        x * scale, p["w"], (1, 1), ((padding, padding), (padding, padding)),
        dimension_numbers=("NCHW", "OIHW", "NCHW"),
        precision=lax.Precision.HIGHEST)
    return y + p["b"].reshape(1, -1, 1, 1)


def _avg_pool_ref(x):
    N, C, H, W = x.shape
    return x.reshape(N, C, H // 2, 2, W // 2, 2).mean(axis=(3, 5))


def _conv_block_ref(block, x):
    x = _leaky_ref(_ws_conv_ref(block["conv1"], x, 1))
    x = _leaky_ref(_ws_conv_ref(block["conv2"], x, 1))
    return x


def _minibatch_std_ref(x):
    stat = jnp.std(x, axis=0, ddof=1).mean()
    stat = jnp.full((x.shape[0], 1, x.shape[2], x.shape[3]), stat, x.dtype)
    return jnp.concatenate([x, stat], axis=1)


def critic_forward_ref(params, x, alpha, steps):
    n_blocks = len(params["prog_blocks"])
    cur_step = n_blocks - steps
    out = _leaky_ref(_ws_conv_ref(params["rgb_layers"][cur_step], x, 0))
    if steps > 0:
        downscaled = _leaky_ref(_ws_conv_ref(params["rgb_layers"][cur_step + 1],
                                             _avg_pool_ref(x), 0))
        out = _avg_pool_ref(_conv_block_ref(params["prog_blocks"][cur_step], out))
        out = alpha * out + (1.0 - alpha) * downscaled
        for step in range(cur_step + 1, n_blocks):
            out = _avg_pool_ref(_conv_block_ref(params["prog_blocks"][step], out))
    out = _minibatch_std_ref(out)
    f1, f2, f3 = params["final_block"]
    out = _leaky_ref(_ws_conv_ref(f1, out, 1))
    out = _leaky_ref(_ws_conv_ref(f2, out, 0))
    out = _ws_conv_ref(f3, out, 0)
    return out.reshape(out.shape[0], -1)


# ---------------------------------------------------------------------------
if __name__ == "__main__":
    key = jax.random.PRNGKey(0)
    key, k_params, k_x = jax.random.split(key, 3)

    in_channels, img_channels = 32, 3
    steps, alpha = 2, 0.5                 # 16x16 input resolution (4 * 2**steps)
    N = 2
    res = 4 * 2 ** steps

    params = init_critic(k_params, in_channels, img_channels)
    x = jax.random.normal(k_x, (N, img_channels, res, res), dtype=jnp.float32)

    out = critic_forward(params, x, alpha, steps)
    out = jax.block_until_ready(out)

    ref = critic_forward_ref(params, x, alpha, steps)
    assert out.shape == (N, 1) and ref.shape == (N, 1)
    assert jnp.allclose(out, ref, atol=2e-3, rtol=2e-3)

    print("KERNEL_OK")
</pallas_src>

<mosaic_0001>
module attributes {stable_mosaic.version = 11 : i64} {
  func.func @_wsconv_kernel(%arg0: i32, %arg1: i32, %arg2: memref<1x16x16x128xf32, #tpu.memory_space<vmem>>, %arg3: memref<1x1x128x128xf32, #tpu.memory_space<vmem>>, %arg4: memref<1x128xf32, #tpu.memory_space<vmem>>, %arg5: memref<1x16x16x128xf32, #tpu.memory_space<vmem>>, %arg6: memref<256x128xf32, #tpu.memory_space<vmem>>) attributes {dimension_semantics = [#tpu.dimension_semantics<parallel>, #tpu.dimension_semantics<parallel>], iteration_bounds = array<i64: 2, 1>, scalar_prefetch = 0 : i64, scratch_operands = 1 : i64, tpu.core_type = #tpu.core_type<tc>, window_params = [{transform_indices = @transform_0, window_bounds = array<i64: 1, 16, 16, 128>}, {transform_indices = @transform_1, window_bounds = array<i64: 1, 1, 128, 128>}, {transform_indices = @transform_2, window_bounds = array<i64: 1, 128>}, {transform_indices = @transform_3, window_bounds = array<i64: 1, 16, 16, 128>}]} {
    %cst = arith.constant 0.000000e+00 : f32
    %0 = vector.broadcast %cst : f32 to vector<256x128xf32>
    %c0 = arith.constant 0 : index
    %c0_0 = arith.constant 0 : index
    %1 = vector.load %arg6[%c0, %c0_0] : memref<256x128xf32, #tpu.memory_space<vmem>>, vector<256x128xf32>
    tpu.vector_store %arg6[%c0, %c0_0], %0 {strides = array<i32>} : memref<256x128xf32, #tpu.memory_space<vmem>>, vector<256x128xf32>,
    %c0_1 = arith.constant 0 : index
    %c0_2 = arith.constant 0 : index
    %c0_3 = arith.constant 0 : index
    %c0_4 = arith.constant 0 : index
    %2 = vector.load %arg2[%c0_1, %c0_2, %c0_3, %c0_4] : memref<1x16x16x128xf32, #tpu.memory_space<vmem>>, vector<1x16x16x128xf32>
    %3 = vector.shape_cast %2 : vector<1x16x16x128xf32> to vector<16x16x128xf32>
    %4 = vector.shape_cast %3 : vector<16x16x128xf32> to vector<256x128xf32>
    %c0_5 = arith.constant 0 : index
    %c0_6 = arith.constant 0 : index
    %5 = vector.load %arg6[%c0_5, %c0_6] : memref<256x128xf32, #tpu.memory_space<vmem>>, vector<256x128xf32>
    %c0_7 = arith.constant 0 : index
    %c0_8 = arith.constant 0 : index
    %c0_9 = arith.constant 0 : index
    %c0_10 = arith.constant 0 : index
    %6 = vector.load %arg3[%c0_7, %c0_8, %c0_9, %c0_10] : memref<1x1x128x128xf32, #tpu.memory_space<vmem>>, vector<1x1x128x128xf32>
    %7 = vector.shape_cast %6 : vector<1x1x128x128xf32> to vector<128x128xf32>
    %cst_11 = arith.constant dense<0.000000e+00> : vector<256x128xf32>
    %8 = tpu.matmul %4, %7, %cst_11 {dimension_numbers = #tpu.dot_dimension_numbers<[1], [0], [0], [1], [0, 0, 1, 1], [], []>} : vector<256x128xf32>, vector<128x128xf32>, vector<256x128xf32> -> vector<256x128xf32>
    %9 = arith.addf %5, %8 : vector<256x128xf32>
    %c0_12 = arith.constant 0 : index
    %c0_13 = arith.constant 0 : index
    %10 = vector.load %arg6[%c0_12, %c0_13] : memref<256x128xf32, #tpu.memory_space<vmem>>, vector<256x128xf32>
    tpu.vector_store %arg6[%c0_12, %c0_13], %9 {strides = array<i32>} : memref<256x128xf32, #tpu.memory_space<vmem>>, vector<256x128xf32>,
    %c0_14 = arith.constant 0 : index
    %c0_15 = arith.constant 0 : index
    %11 = vector.load %arg6[%c0_14, %c0_15] : memref<256x128xf32, #tpu.memory_space<vmem>>, vector<256x128xf32>
    %c0_16 = arith.constant 0 : index
    %c0_17 = arith.constant 0 : index
    %12 = vector.load %arg4[%c0_16, %c0_17] : memref<1x128xf32, #tpu.memory_space<vmem>>, vector<1x128xf32>
    %13 = vector.broadcast %12 : vector<1x128xf32> to vector<256x128xf32>
    %14 = arith.addf %11, %13 : vector<256x128xf32>
    %cst_18 = arith.constant 0.000000e+00 : f32
    %15 = vector.broadcast %cst_18 : f32 to vector<256x128xf32>
    %16 = arith.cmpf oge, %14, %15 : vector<256x128xf32>
    %cst_19 = arith.constant 2.000000e-01 : f32
    %17 = vector.broadcast %cst_19 : f32 to vector<256x128xf32>
    %18 = arith.mulf %14, %17 : vector<256x128xf32>
    %19 = arith.select %16, %14, %18 : vector<256x128xi1>, vector<256x128xf32>
    %20 = vector.shape_cast %19 : vector<256x128xf32> to vector<16x16x128xf32>
    %c0_20 = arith.constant 0 : index
    %c0_21 = arith.constant 0 : index
    %c0_22 = arith.constant 0 : index
    %c0_23 = arith.constant 0 : index
    %21 = vector.load %arg5[%c0_20, %c0_21, %c0_22, %c0_23] : memref<1x16x16x128xf32, #tpu.memory_space<vmem>>, vector<1x16x16x128xf32>
    %22 = vector.shape_cast %21 : vector<1x16x16x128xf32> to vector<16x16x128xf32>
    %23 = vector.shape_cast %20 : vector<16x16x128xf32> to vector<1x16x16x128xf32>
    tpu.vector_store %arg5[%c0_20, %c0_21, %c0_22, %c0_23], %23 {strides = array<i32>} : memref<1x16x16x128xf32, #tpu.memory_space<vmem>>, vector<1x16x16x128xf32>,
    return
  }
  func.func @transform_0(%arg0: i32, %arg1: i32) -> (i32, i32, i32, i32) {
    %c0_i32 = arith.constant 0 : i32
    %c0_i32_0 = arith.constant 0 : i32
    %c0_i32_1 = arith.constant 0 : i32
    %c0_i32_2 = arith.constant 0 : i32
    return %arg0, %c0_i32, %c0_i32_0, %c0_i32_1 : i32, i32, i32, i32
  }
  func.func @transform_1(%arg0: i32, %arg1: i32) -> (i32, i32, i32, i32) {
    %c0_i32 = arith.constant 0 : i32
    %c0_i32_0 = arith.constant 0 : i32
    %c0_i32_1 = arith.constant 0 : i32
    %c0_i32_2 = arith.constant 0 : i32
    return %c0_i32, %c0_i32_0, %c0_i32_1, %arg1 : i32, i32, i32, i32
  }
  func.func @transform_2(%arg0: i32, %arg1: i32) -> (i32, i32) {
    %c0_i32 = arith.constant 0 : i32
    %c0_i32_0 = arith.constant 0 : i32
    return %c0_i32, %arg1 : i32, i32
  }
  func.func @transform_3(%arg0: i32, %arg1: i32) -> (i32, i32, i32, i32) {
    %c0_i32 = arith.constant 0 : i32
    %c0_i32_0 = arith.constant 0 : i32
    %c0_i32_1 = arith.constant 0 : i32
    return %arg0, %c0_i32, %c0_i32_0, %arg1 : i32, i32, i32, i32
  }
}

</mosaic_0001>

<llo_original>
// kernel: tpu_custom_call.1
$region0: #{tpu_custom_call.1}
  #allocation0 [shape = 'u32[]', space=smem, size = 0x4, offset = 0x4, fixed_abs, tag = 'smem constant byte address 0x4 - core index']
  #allocation1 [shape = 'u32[144,128]{1,0:T(1,128)}', space=vmem, size = 0x12000, scoped, tag = 'internal scratch']
  #allocation2 [shape = 'f32[256,128]{1,0:T(8,128)}', space=vmem, size = 0x20000, scoped, tag = 'scratch operand']
  %s0 = inlined_call_operand.hbm [shape: f32[2,16,16,128], index: 0, kind: input, shape index: {}]
  %s1 = inlined_call_operand.hbm [shape: f32[1,1,128,128], index: 1, kind: input, shape index: {}]
  %s2 = inlined_call_operand.vmem [shape: f32[1,128], index: 2, kind: input, shape index: {}]
  %s3 = inlined_call_operand.hbm [shape: f32[2,16,16,128], index: 3, kind: output, shape index: {}]
  %s4 = sld [smem:[#allocation0]]
  $region53: #{tpu_custom_call.1} parent=0
    _
  %s6 = ssub.s32 1, %s4
  %s7 = scalar_select 0, %s6, %s4
  $region1: #{tpu_custom_call.1} parent=0
    #allocation3 [shape = 'u8[262144]{0}', space=vmem, size = 0x40000, scoped, tag = 'input window, operand 0']
    #allocation4 [shape = 's32[2]{0}', space=sflag, size = 0x8, scoped, tag = 'scoped memory for tpu_custom_call.1']
    #allocation5 [shape = 's32[2]{0}', space=sflag, size = 0x8, scoped, tag = 'scoped memory for tpu_custom_call.1']
    #allocation6 [shape = 'u8[65536]{0}', space=vmem, size = 0x10000, scoped, tag = 'input window, operand 1, single buffered']
    #allocation7 [shape = 's32[1]{0}', space=sflag, size = 0x4, scoped, tag = 'scoped memory for tpu_custom_call.1']
    #allocation8 [shape = 'u8[262144]{0}', space=vmem, size = 0x40000, scoped, tag = 'output window, operand 0']
    %8 = vsyncpa [#allocation4], 0
    %s9 = scalar_lea.sflag [#allocation4], 1
    %10 = vsyncpa %s9, 0
    %11 = vsyncpa [#allocation7], 0
    %12 = vsyncpa [#allocation5], 0
    %s13 = scalar_lea.sflag [#allocation5], 1
    %14 = vsyncpa %s13, 0
    loop: start=0, step=1, limit=4
    $region2: #{tpu_custom_call.1} parent=1 // loop_pre_header
      _
    $region3: #{tpu_custom_call.1} parent=1 // loop_header
      %s16 = sphi 0, %s20
      %p17 = scmp.ge.s32.totalorder %s16, 4
      %s23 = sphi 0, %s35
      %s24 = sphi 0, %s31
      %s25 = sphi 0, %s23
      %s26 = sphi 0, %s24
      %s27 = sphi 0, %s25
      %s28 = sphi 0, %s26
      %s38 = sphi 0, %s40
      %s41 = sphi 0, %s38
      %s42 = sphi 0, %s41
      %s58 = sphi 0, %s42
      %s64 = sphi 0, %s66
      %s67 = sphi 0, %s64
      %s68 = sphi 0, %s67
      %s84 = sphi 0, %s68
      %s90 = sphi 0, %s92
      %s93 = sphi 0, %s90
      %s94 = sphi 0, %s93
      %s110 = sphi 0, %s94
      %s118 = sphi 0, %s120
      %s121 = sphi 0, %s118
      %s122 = sphi 0, %s121
      %s138 = sphi 0, %s122
    $region4: #{tpu_custom_call.1} parent=1 // loop_header_branch
      %19 = sbr.rel (%p17) target = $region8
    $region5: #{tpu_custom_call.1} parent=1 // loop_body
      %s21 = ssub.s32 %s16, 1
      %s22 = ssub.s32 %s16, 2
      %s29 = sadd.s32 1, %s24
      %p30 = scmp.ge.s32.totalorder %s29, 1
      %s31 = scalar_select %p30, 0, %s29
      %s32 = sadd.s32 1, %s23
      %s33 = scalar_select %p30, %s32, %s23
      %p34 = scmp.ge.s32.totalorder %s33, 2
      %s35 = scalar_select %p34, 0, %s33
      %s36 = ssub.s32 %s23, %s35
      %p37 = scmp.eq.s32.totalorder %s36, 0
      %s39 = sadd.s32 %s38, 1
      %s40 = scalar_select %p37, %s38, %s39
      %p43 = pneg %p37
      %p44 = scmp.eq.s32.totalorder %s16, 1
      %p45 = por %p43, %p44
      %p46 = scmp.ne.s32.totalorder %s38, %s41
      %p47 = scmp.eq.s32.totalorder %s16, 0
      %p48 = por %p46, %p47
      %p49 = scmp.ne.s32.totalorder %s38, %s41
      %p50 = scmp.eq.s32.totalorder %s21, 1
      %p51 = por %p49, %p50
      %p52 = scmp.ne.s32.totalorder %s41, %s42
      %p53 = scmp.eq.s32.totalorder %s21, 0
      %p54 = por %p52, %p53
      %p55 = scmp.ne.s32.totalorder %s41, %s42
      %p56 = scmp.eq.s32.totalorder %s22, 1
      %p57 = por %p55, %p56
      %p59 = scmp.ne.s32.totalorder %s42, %s58
      %p60 = scmp.eq.s32.totalorder %s22, 0
      %p61 = por %p59, %p60
      %s62 = ssub.s32 %s24, %s31
      %p63 = scmp.eq.s32.totalorder %s62, 0
      %s65 = sadd.s32 %s64, 1
      %s66 = scalar_select %p63, %s64, %s65
      %p69 = pneg %p63
      %p70 = scmp.eq.s32.totalorder %s16, 1
      %p71 = por %p69, %p70
      %p72 = scmp.ne.s32.totalorder %s64, %s67
      %p73 = scmp.eq.s32.totalorder %s16, 0
      %p74 = por %p72, %p73
      %p75 = scmp.ne.s32.totalorder %s64, %s67
      %p76 = scmp.eq.s32.totalorder %s21, 1
      %p77 = por %p75, %p76
      %p78 = scmp.ne.s32.totalorder %s67, %s68
      %p79 = scmp.eq.s32.totalorder %s21, 0
      %p80 = por %p78, %p79
      %p81 = scmp.ne.s32.totalorder %s67, %s68
      %p82 = scmp.eq.s32.totalorder %s22, 1
      %p83 = por %p81, %p82
      %p85 = scmp.ne.s32.totalorder %s68, %s84
      %p86 = scmp.eq.s32.totalorder %s22, 0
      %p87 = por %p85, %p86
      %s88 = ssub.s32 %s24, %s31
      %p89 = scmp.eq.s32.totalorder %s88, 0
      %s91 = sadd.s32 %s90, 1
      %s92 = scalar_select %p89, %s90, %s91
      %p95 = pneg %p89
      %p96 = scmp.eq.s32.totalorder %s16, 1
      %p97 = por %p95, %p96
      %p98 = scmp.ne.s32.totalorder %s90, %s93
      %p99 = scmp.eq.s32.totalorder %s16, 0
      %p100 = por %p98, %p99
      %p101 = scmp.ne.s32.totalorder %s90, %s93
      %p102 = scmp.eq.s32.totalorder %s21, 1
      %p103 = por %p101, %p102
      %p104 = scmp.ne.s32.totalorder %s93, %s94
      %p105 = scmp.eq.s32.totalorder %s21, 0
      %p106 = por %p104, %p105
      %p107 = scmp.ne.s32.totalorder %s93, %s94
      %p108 = scmp.eq.s32.totalorder %s22, 1
      %p109 = por %p107, %p108
      %p111 = scmp.ne.s32.totalorder %s94, %s110
      %p112 = scmp.eq.s32.totalorder %s22, 0
      %p113 = por %p111, %p112
      %s114 = ssub.s32 %s23, %s35
      %s115 = ssub.s32 %s24, %s31
      %s116 = sor.u32 %s114, %s115
      %p117 = scmp.eq.s32.totalorder %s116, 0
      %s119 = sadd.s32 %s118, 1
      %s120 = scalar_select %p117, %s118, %s119
      %p123 = pneg %p117
      %p124 = scmp.eq.s32.totalorder %s16, 1
      %p125 = por %p123, %p124
      %p126 = scmp.ne.s32.totalorder %s118, %s121
      %p127 = scmp.eq.s32.totalorder %s16, 0
      %p128 = por %p126, %p127
      %p129 = scmp.ne.s32.totalorder %s118, %s121
      %p130 = scmp.eq.s32.totalorder %s21, 1
      %p131 = por %p129, %p130
      %p132 = scmp.ne.s32.totalorder %s121, %s122
      %p133 = scmp.eq.s32.totalorder %s21, 0
      %p134 = por %p132, %p133
      %p135 = scmp.ne.s32.totalorder %s121, %s122
      %p136 = scmp.eq.s32.totalorder %s22, 1
      %p137 = por %p135, %p136
      %p139 = scmp.ne.s32.totalorder %s122, %s138
      %p140 = scmp.eq.s32.totalorder %s22, 0
      %p141 = por %p139, %p140
      %p142 = scmp.le.s32.totalorder 1, %s16
      %p143 = scmp.lt.s32.totalorder %s16, 3
      %p144 = pnand %p142, %p143
      %p145 = pneg %p144
      // Predicated region
      $region9: #{tpu_custom_call.1} parent=5 // pred_check
        _
      $region10: #{tpu_custom_call.1} parent=5 // pred_check_branch
        %147 = sbr.rel (%p144) target = $region12
      $region11: #{tpu_custom_call.1} parent=5 // pred_region
        %s148 = ssub.s32 %s16, 1
        // Predicated region
        $region13: #{tpu_custom_call.1} parent=11 // pred_check
          %p149 = pneg %p80
        $region14: #{tpu_custom_call.1} parent=11 // pred_check_branch
          %151 = sbr.rel (%p149) target = $region16
        $region15: #{tpu_custom_call.1} parent=11 // pred_region
          %s153 = ssub.s32 2048, 2048
          %154 = vsyncadd [#allocation7], %s153
          %s155 = smul.addr %s26, 128
          %s156 = scalar_lea.hbm %s1, %s155
          %s157 = sshll.u32 [#allocation6], 4
          %s158 = int_to_ptr.vmem [resolvable:$true] %s157
          %163 = dma.hbm_to_vmem [thread:$0]  %s156, 2048, %s158, [#allocation7], 128, 128, 8
        $region16: #{tpu_custom_call.1} parent=11 // pred_fallthru
          _
        // Predicated region
        $region17: #{tpu_custom_call.1} parent=11 // pred_check
          %p164 = pneg %p106
        $region18: #{tpu_custom_call.1} parent=11 // pred_check_branch
          %166 = sbr.rel (%p164) target = $region20
        $region19: #{tpu_custom_call.1} parent=11 // pred_region
          %p167 = scmp.lt.s32.totalorder %s26, 0
          %s168 = scalar_select %p167, %s26, 0
          %s169 = scalar_lea.vmem %s2, %s168
        $region20: #{tpu_custom_call.1} parent=11 // pred_fallthru
          _
      $region12: #{tpu_custom_call.1} parent=5 // pred_fallthru
        _
      %p170 = scmp.lt.s32.totalorder %s16, 2
      // Predicated region
      $region21: #{tpu_custom_call.1} parent=5 // pred_check
        %p171 = pneg %p170
      $region22: #{tpu_custom_call.1} parent=5 // pred_check_branch
        %173 = sbr.rel (%p171) target = $region24
      $region23: #{tpu_custom_call.1} parent=5 // pred_region
        // Predicated region
        $region25: #{tpu_custom_call.1} parent=23 // pred_check
          %p174 = pneg %p48
        $region26: #{tpu_custom_call.1} parent=23 // pred_check_branch
          %176 = sbr.rel (%p174) target = $region28
        $region27: #{tpu_custom_call.1} parent=23 // pred_region
          %s177 = sand.u32 %s38, 1
          %s178 = scalar_lea.sflag [#allocation4], %s177
          %s179 = sand.u32 %s38, 1
          %s180 = smul.addr %s179, 256
          %s181 = scalar_lea.vmem [#allocation3], %s180
          %s183 = ssub.s32 4096, 4096
          %184 = vsyncadd %s178, %s183
          %s185 = smul.addr %s23, 32
          %s186 = smul.addr %s185, 128
          %s187 = scalar_lea.hbm %s0, %s186
          %s188 = sshll.u32 %s181, 4
          %s189 = int_to_ptr.vmem [resolvable:$true] %s188
          %194 = dma.hbm_to_vmem [thread:$0]  %s187, 4096, %s189, %s178, 128, 128, 8
        $region28: #{tpu_custom_call.1} parent=23 // pred_fallthru
          _
      $region24: #{tpu_custom_call.1} parent=5 // pred_fallthru
        _
      %p195 = scmp.le.s32.totalorder 1, %s16
      %p196 = scmp.lt.s32.totalorder %s16, 3
      %p197 = pnand %p195, %p196
      %p198 = pneg %p197
      // Predicated region
      $region29: #{tpu_custom_call.1} parent=5 // pred_check
        _
      $region30: #{tpu_custom_call.1} parent=5 // pred_check_branch
        %200 = sbr.rel (%p197) target = $region32
      $region31: #{tpu_custom_call.1} parent=5 // pred_region
        %s201 = ssub.s32 %s16, 1
        %s202 = sand.u32 %s41, 1
        %s203 = scalar_lea.sflag [#allocation4], %s202
        %s204 = sand.u32 %s41, 1
        %s205 = smul.addr %s204, 256
        %s206 = scalar_lea.vmem [#allocation3], %s205
        // Predicated region
        $region33: #{tpu_custom_call.1} parent=31 // pred_check
          %p207 = pneg %p54
        $region34: #{tpu_custom_call.1} parent=31 // pred_check_branch
          %209 = sbr.rel (%p207) target = $region36
        $region35: #{tpu_custom_call.1} parent=31 // pred_region
          %210 = dma.done %s203, 4096
        $region36: #{tpu_custom_call.1} parent=31 // pred_fallthru
          _
        // Predicated region
        $region37: #{tpu_custom_call.1} parent=31 // pred_check
          %p211 = pneg %p80
        $region38: #{tpu_custom_call.1} parent=31 // pred_check_branch
          %213 = sbr.rel (%p211) target = $region40
        $region39: #{tpu_custom_call.1} parent=31 // pred_region
          %214 = dma.done [#allocation7], 2048
        $region40: #{tpu_custom_call.1} parent=31 // pred_fallthru
          _
        %s215 = sand.u32 %s41, 1
        %s216 = scalar_lea.sflag [#allocation4], %s215
        %s217 = sand.u32 %s41, 1
        %s218 = smul.addr %s217, 256
        %s219 = scalar_lea.vmem [#allocation3], %s218
        %p220 = pneg %p54
        %p221 = pneg %p51
        %p222 = pneg %p80
        %p223 = pneg %p77
        %p224 = scmp.lt.s32.totalorder %s26, 0
        %s225 = scalar_select %p224, %s26, 0
        %s226 = scalar_lea.vmem %s2, %s225
        %p227 = pneg %p106
        %p228 = pneg %p103
        %p229 = pneg %p134
        %p230 = pneg %p131
        %s231 = sand.u32 %s121, 1
        %s232 = scalar_lea.sflag [#allocation5], %s231
        %s233 = sand.u32 %s121, 1
        %s234 = smul.addr %s233, 256
        %s235 = scalar_lea.vmem [#allocation8], %s234
        %p236 = scmp.lt.s32.totalorder %s26, 0
        %s237 = scalar_select %p236, %s26, 0
        %s238 = scalar_lea.vmem %s2, %s237
        %239 = vst [vmem:[#allocation2] sm:$0xff] 0.0
        %240 = vst [vmem:[#allocation2 + $0x8] sm:$0xff] 0.0
        %241 = vst [vmem:[#allocation2 + $0x10] sm:$0xff] 0.0
        %242 = vst [vmem:[#allocation2 + $0x18] sm:$0xff] 0.0
        %243 = vst [vmem:[#allocation2 + $0x20] sm:$0xff] 0.0
        %244 = vst [vmem:[#allocation2 + $0x28] sm:$0xff] 0.0
        %245 = vst [vmem:[#allocation2 + $0x30] sm:$0xff] 0.0
        %246 = vst [vmem:[#allocation2 + $0x38] sm:$0xff] 0.0
        %247 = vst [vmem:[#allocation2 + $0x40] sm:$0xff] 0.0
        %248 = vst [vmem:[#allocation2 + $0x48] sm:$0xff] 0.0
        %249 = vst [vmem:[#allocation2 + $0x50] sm:$0xff] 0.0
        %250 = vst [vmem:[#allocation2 + $0x58] sm:$0xff] 0.0
        %251 = vst [vmem:[#allocation2 + $0x60] sm:$0xff] 0.0
        %252 = vst [vmem:[#allocation2 + $0x68] sm:$0xff] 0.0
        %253 = vst [vmem:[#allocation2 + $0x70] sm:$0xff] 0.0
        %254 = vst [vmem:[#allocation2 + $0x78] sm:$0xff] 0.0
        %255 = vst [vmem:[#allocation2 + $0x80] sm:$0xff] 0.0
        %256 = vst [vmem:[#allocation2 + $0x88] sm:$0xff] 0.0
        %257 = vst [vmem:[#allocation2 + $0x90] sm:$0xff] 0.0
        %258 = vst [vmem:[#allocation2 + $0x98] sm:$0xff] 0.0
        %259 = vst [vmem:[#allocation2 + $0xa0] sm:$0xff] 0.0
        %260 = vst [vmem:[#allocation2 + $0xa8] sm:$0xff] 0.0
        %261 = vst [vmem:[#allocation2 + $0xb0] sm:$0xff] 0.0
        %262 = vst [vmem:[#allocation2 + $0xb8] sm:$0xff] 0.0
        %263 = vst [vmem:[#allocation2 + $0xc0] sm:$0xff] 0.0
        %264 = vst [vmem:[#allocation2 + $0xc8] sm:$0xff] 0.0
        %265 = vst [vmem:[#allocation2 + $0xd0] sm:$0xff] 0.0
        %266 = vst [vmem:[#allocation2 + $0xd8] sm:$0xff] 0.0
        %267 = vst [vmem:[#allocation2 + $0xe0] sm:$0xff] 0.0
        %268 = vst [vmem:[#allocation2 + $0xe8] sm:$0xff] 0.0
        %269 = vst [vmem:[#allocation2 + $0xf0] sm:$0xff] 0.0
        %270 = vst [vmem:[#allocation2 + $0xf8] sm:$0xff] 0.0
        %v271 = vld [vmem:[%s206] sm:$0xff]
        %v272 = vld [vmem:[%s206 + $0x8] sm:$0xff]
        %v273 = vld [vmem:[%s206 + $0x10] sm:$0xff]
        %v274 = vld [vmem:[%s206 + $0x18] sm:$0xff]
        %v275 = vld [vmem:[%s206 + $0x20] sm:$0xff]
        %v276 = vld [vmem:[%s206 + $0x28] sm:$0xff]
        %v277 = vld [vmem:[%s206 + $0x30] sm:$0xff]
        %v278 = vld [vmem:[%s206 + $0x38] sm:$0xff]
        %v279 = vld [vmem:[%s206 + $0x40] sm:$0xff]
        %v280 = vld [vmem:[%s206 + $0x48] sm:$0xff]
        %v281 = vld [vmem:[%s206 + $0x50] sm:$0xff]
        %v282 = vld [vmem:[%s206 + $0x58] sm:$0xff]
        %v283 = vld [vmem:[%s206 + $0x60] sm:$0xff]
        %v284 = vld [vmem:[%s206 + $0x68] sm:$0xff]
        %v285 = vld [vmem:[%s206 + $0x70] sm:$0xff]
        %v286 = vld [vmem:[%s206 + $0x78] sm:$0xff]
        %v287 = vld [vmem:[%s206 + $0x80] sm:$0xff]
        %v288 = vld [vmem:[%s206 + $0x88] sm:$0xff]
        %v289 = vld [vmem:[%s206 + $0x90] sm:$0xff]
        %v290 = vld [vmem:[%s206 + $0x98] sm:$0xff]
        %v291 = vld [vmem:[%s206 + $0xa0] sm:$0xff]
        %v292 = vld [vmem:[%s206 + $0xa8] sm:$0xff]
        %v293 = vld [vmem:[%s206 + $0xb0] sm:$0xff]
        %v294 = vld [vmem:[%s206 + $0xb8] sm:$0xff]
        %v295 = vld [vmem:[%s206 + $0xc0] sm:$0xff]
        %v296 = vld [vmem:[%s206 + $0xc8] sm:$0xff]
        %v297 = vld [vmem:[%s206 + $0xd0] sm:$0xff]
        %v298 = vld [vmem:[%s206 + $0xd8] sm:$0xff]
        %v299 = vld [vmem:[%s206 + $0xe0] sm:$0xff]
        %v300 = vld [vmem:[%s206 + $0xe8] sm:$0xff]
        %v301 = vld [vmem:[%s206 + $0xf0] sm:$0xff]
        %v302 = vld [vmem:[%s206 + $0xf8] sm:$0xff]
        %v303 = vld [vmem:[#allocation2] sm:$0xff]
        %v304 = vld [vmem:[#allocation2 + $0x8] sm:$0xff]
        %v305 = vld [vmem:[#allocation2 + $0x10] sm:$0xff]
        %v306 = vld [vmem:[#allocation2 + $0x18] sm:$0xff]
        %v307 = vld [vmem:[#allocation2 + $0x20] sm:$0xff]
        %v308 = vld [vmem:[#allocation2 + $0x28] sm:$0xff]
        %v309 = vld [vmem:[#allocation2 + $0x30] sm:$0xff]
        %v310 = vld [vmem:[#allocation2 + $0x38] sm:$0xff]
        %v311 = vld [vmem:[#allocation2 + $0x40] sm:$0xff]
        %v312 = vld [vmem:[#allocation2 + $0x48] sm:$0xff]
        %v313 = vld [vmem:[#allocation2 + $0x50] sm:$0xff]
        %v314 = vld [vmem:[#allocation2 + $0x58] sm:$0xff]
        %v315 = vld [vmem:[#allocation2 + $0x60] sm:$0xff]
        %v316 = vld [vmem:[#allocation2 + $0x68] sm:$0xff]
        %v317 = vld [vmem:[#allocation2 + $0x70] sm:$0xff]
        %v318 = vld [vmem:[#allocation2 + $0x78] sm:$0xff]
        %v319 = vld [vmem:[#allocation2 + $0x80] sm:$0xff]
        %v320 = vld [vmem:[#allocation2 + $0x88] sm:$0xff]
        %v321 = vld [vmem:[#allocation2 + $0x90] sm:$0xff]
        %v322 = vld [vmem:[#allocation2 + $0x98] sm:$0xff]
        %v323 = vld [vmem:[#allocation2 + $0xa0] sm:$0xff]
        %v324 = vld [vmem:[#allocation2 + $0xa8] sm:$0xff]
        %v325 = vld [vmem:[#allocation2 + $0xb0] sm:$0xff]
        %v326 = vld [vmem:[#allocation2 + $0xb8] sm:$0xff]
        %v327 = vld [vmem:[#allocation2 + $0xc0] sm:$0xff]
        %v328 = vld [vmem:[#allocation2 + $0xc8] sm:$0xff]
        %v329 = vld [vmem:[#allocation2 + $0xd0] sm:$0xff]
        %v330 = vld [vmem:[#allocation2 + $0xd8] sm:$0xff]
        %v331 = vld [vmem:[#allocation2 + $0xe0] sm:$0xff]
        %v332 = vld [vmem:[#allocation2 + $0xe8] sm:$0xff]
        %v333 = vld [vmem:[#allocation2 + $0xf0] sm:$0xff]
        %v334 = vld [vmem:[#allocation2 + $0xf8] sm:$0xff]
        %v335 = vld [vmem:[#allocation6] sm:$0xff]
        %v336 = vld [vmem:[#allocation6 + $0x8] sm:$0xff]
        %v337 = vld [vmem:[#allocation6 + $0x10] sm:$0xff]
        %v338 = vld [vmem:[#allocation6 + $0x18] sm:$0xff]
        %v339 = vld [vmem:[#allocation6 + $0x20] sm:$0xff]
        %v340 = vld [vmem:[#allocation6 + $0x28] sm:$0xff]
        %v341 = vld [vmem:[#allocation6 + $0x30] sm:$0xff]
        %v342 = vld [vmem:[#allocation6 + $0x38] sm:$0xff]
        %v343 = vld [vmem:[#allocation6 + $0x40] sm:$0xff]
        %v344 = vld [vmem:[#allocation6 + $0x48] sm:$0xff]
        %v345 = vld [vmem:[#allocation6 + $0x50] sm:$0xff]
        %v346 = vld [vmem:[#allocation6 + $0x58] sm:$0xff]
        %v347 = vld [vmem:[#allocation6 + $0x60] sm:$0xff]
        %v348 = vld [vmem:[#allocation6 + $0x68] sm:$0xff]
        %v349 = vld [vmem:[#allocation6 + $0x70] sm:$0xff]
        %v350 = vld [vmem:[#allocation6 + $0x78] sm:$0xff]
        %351 = vmatprep.subr.mxu0 0.0
        %352 = vmatpush1.msra.mxu0 %v335
        %353 = vmatprep.subr.mxu0 0.0
        %354 = vmatpush1.msra.mxu0 %v336
        %355 = vmatprep.subr.mxu0 0.0
        %356 = vmatpush1.msra.mxu0 %v337
        %357 = vmatprep.subr.mxu0 0.0
        %358 = vmatpush1.msra.mxu0 %v338
        %359 = vmatprep.subr.mxu0 0.0
        %360 = vmatpush1.msra.mxu0 %v339
        %361 = vmatprep.subr.mxu0 0.0
        %362 = vmatpush1.msra.mxu0 %v340
        %363 = vmatprep.subr.mxu0 0.0
        %364 = vmatpush1.msra.mxu0 %v341
        %365 = vmatprep.subr.mxu0 0.0
        %366 = vmatpush1.msra.mxu0 %v342
        %367 = vmatprep.subr.mxu0 0.0
        %368 = vmatpush1.msra.mxu0 %v343
        %369 = vmatprep.subr.mxu0 0.0
        %370 = vmatpush1.msra.mxu0 %v344
        %371 = vmatprep.subr.mxu0 0.0
        %372 = vmatpush1.msra.mxu0 %v345
        %373 = vmatprep.subr.mxu0 0.0
        %374 = vmatpush1.msra.mxu0 %v346
        %375 = vmatprep.subr.mxu0 0.0
        %376 = vmatpush1.msra.mxu0 %v347
        %377 = vmatprep.subr.mxu0 0.0
        %378 = vmatpush1.msra.mxu0 %v348
        %379 = vmatprep.subr.mxu0 0.0
        %380 = vmatpush1.msra.mxu0 %v349
        %381 = vmatprep.subr.mxu0 0.0
        %382 = vmatpush1.msra.mxu0 %v350
        %383 = vmatprep.subr.mxu0 0.0
        %384 = vmatpush1.msra.mxu0 0.0
        %385 = vmatprep.subr.mxu0 0.0
        %386 = vmatpush1.msra.mxu0 0.0
        %387 = vmatprep.subr.mxu0 0.0
        %388 = vmatpush1.msra.mxu0 0.0
        %389 = vmatprep.subr.mxu0 0.0
        %390 = vmatpush1.msra.mxu0 0.0
        %391 = vmatprep.subr.mxu0 0.0
        %392 = vmatpush1.msra.mxu0 0.0
        %393 = vmatprep.subr.mxu0 0.0
        %394 = vmatpush1.msra.mxu0 0.0
        %395 = vmatprep.subr.mxu0 0.0
        %396 = vmatpush1.msra.mxu0 0.0
        %397 = vmatprep.subr.mxu0 0.0
        %398 = vmatpush1.msra.mxu0 0.0
        %399 = vmatprep.subr.mxu0 0.0
        %400 = vmatpush1.msra.mxu0 0.0
        %401 = vmatprep.subr.mxu0 0.0
        %402 = vmatpush1.msra.mxu0 0.0
        %403 = vmatprep.subr.mxu0 0.0
        %404 = vmatpush1.msra.mxu0 0.0
        %405 = vmatprep.subr.mxu0 0.0
        %406 = vmatpush1.msra.mxu0 0.0
        %407 = vmatprep.subr.mxu0 0.0
        %408 = vmatpush1.msra.mxu0 0.0
        %409 = vmatprep.subr.mxu0 0.0
        %410 = vmatpush1.msra.mxu0 0.0
        %411 = vmatprep.subr.mxu0 0.0
        %412 = vmatpush1.msra.mxu0 0.0
        %413 = vmatprep.subr.mxu0 0.0
        %414 = vmatpush1.msra.mxu0 0.0
        %415 = vmatprep.mubr.f32.mxu0 0.0
        %416 = vmatmul.mubr.f32.gmra.mrb[0].mxu0 %v271
        %v417 = vpop.f32.mrb[0].mxu0
        %v418 = vadd.f32 0.0, %v417
        %v419 = vpop.f32.mrb[0].mxu0
        %420 = vmatprep.mubr.f32.mxu0 0.0
        %421 = vmatmul.mubr.f32.gmra.mrb[0].mxu0 %v272
        %v422 = vpop.f32.mrb[0].mxu0
        %v423 = vadd.f32 0.0, %v422
        %v424 = vpop.f32.mrb[0].mxu0
        %425 = vmatprep.mubr.f32.mxu0 0.0
        %426 = vmatmul.mubr.f32.gmra.mrb[0].mxu0 %v273
        %v427 = vpop.f32.mrb[0].mxu0
        %v428 = vadd.f32 0.0, %v427
        %v429 = vpop.f32.mrb[0].mxu0
        %430 = vmatprep.mubr.f32.mxu0 0.0
        %431 = vmatmul.mubr.f32.gmra.mrb[0].mxu0 %v274
        %v432 = vpop.f32.mrb[0].mxu0
        %v433 = vadd.f32 0.0, %v432
        %v434 = vpop.f32.mrb[0].mxu0
        %435 = vmatprep.mubr.f32.mxu0 0.0
        %436 = vmatmul.mubr.f32.gmra.mrb[0].mxu0 %v275
        %v437 = vpop.f32.mrb[0].mxu0
        %v438 = vadd.f32 0.0, %v437
        %v439 = vpop.f32.mrb[0].mxu0
        %440 = vmatprep.mubr.f32.mxu0 0.0
        %441 = vmatmul.mubr.f32.gmra.mrb[0].mxu0 %v276
        %v442 = vpop.f32.mrb[0].mxu0
        %v443 = vadd.f32 0.0, %v442
        %v444 = vpop.f32.mrb[0].mxu0
        %445 = vmatprep.mubr.f32.mxu0 0.0
        %446 = vmatmul.mubr.f32.gmra.mrb[0].mxu0 %v277
        %v447 = vpop.f32.mrb[0].mxu0
        %v448 = vadd.f32 0.0, %v447
        %v449 = vpop.f32.mrb[0].mxu0
        %450 = vmatprep.mubr.f32.mxu0 0.0
        %451 = vmatmul.mubr.f32.gmra.mrb[0].mxu0 %v278
        %v452 = vpop.f32.mrb[0].mxu0
        %v453 = vadd.f32 0.0, %v452
        %v454 = vpop.f32.mrb[0].mxu0
        %455 = vmatprep.mubr.f32.mxu0 0.0
        %456 = vmatmul.mubr.f32.gmra.mrb[0].mxu0 %v279
        %v457 = vpop.f32.mrb[0].mxu0
        %v458 = vadd.f32 0.0, %v457
        %v459 = vpop.f32.mrb[0].mxu0
        %460 = vmatprep.mubr.f32.mxu0 0.0
        %461 = vmatmul.mubr.f32.gmra.mrb[0].mxu0 %v280
        %v462 = vpop.f32.mrb[0].mxu0
        %v463 = vadd.f32 0.0, %v462
        %v464 = vpop.f32.mrb[0].mxu0
        %465 = vmatprep.mubr.f32.mxu0 0.0
        %466 = vmatmul.mubr.f32.gmra.mrb[0].mxu0 %v281
        %v467 = vpop.f32.mrb[0].mxu0
        %v468 = vadd.f32 0.0, %v467
        %v469 = vpop.f32.mrb[0].mxu0
        %470 = vmatprep.mubr.f32.mxu0 0.0
        %471 = vmatmul.mubr.f32.gmra.mrb[0].mxu0 %v282
        %v472 = vpop.f32.mrb[0].mxu0
        %v473 = vadd.f32 0.0, %v472
        %v474 = vpop.f32.mrb[0].mxu0
        %475 = vmatprep.mubr.f32.mxu0 0.0
        %476 = vmatmul.mubr.f32.gmra.mrb[0].mxu0 %v283
        %v477 = vpop.f32.mrb[0].mxu0
        %v478 = vadd.f32 0.0, %v477
        %v479 = vpop.f32.mrb[0].mxu0
        %480 = vmatprep.mubr.f32.mxu0 0.0
        %481 = vmatmul.mubr.f32.gmra.mrb[0].mxu0 %v284
        %v482 = vpop.f32.mrb[0].mxu0
        %v483 = vadd.f32 0.0, %v482
        %v484 = vpop.f32.mrb[0].mxu0
        %485 = vmatprep.mubr.f32.mxu0 0.0
        %486 = vmatmul.mubr.f32.gmra.mrb[0].mxu0 %v285
        %v487 = vpop.f32.mrb[0].mxu0
        %v488 = vadd.f32 0.0, %v487
        %v489 = vpop.f32.mrb[0].mxu0
        %490 = vmatprep.mubr.f32.mxu0 0.0
        %491 = vmatmul.mubr.f32.gmra.mrb[0].mxu0 %v286
        %v492 = vpop.f32.mrb[0].mxu0
        %v493 = vadd.f32 0.0, %v492
        %v494 = vpop.f32.mrb[0].mxu0
        %495 = vmatprep.mubr.f32.mxu0 0.0
        %496 = vmatmul.mubr.f32.gmra.mrb[0].mxu0 %v287
        %v497 = vpop.f32.mrb[0].mxu0
        %v498 = vadd.f32 0.0, %v497
        %v499 = vpop.f32.mrb[0].mxu0
        %500 = vmatprep.mubr.f32.mxu0 0.0
        %501 = vmatmul.mubr.f32.gmra.mrb[0].mxu0 %v288
        %v502 = vpop.f32.mrb[0].mxu0
        %v503 = vadd.f32 0.0, %v502
        %v504 = vpop.f32.mrb[0].mxu0
        %505 = vmatprep.mubr.f32.mxu0 0.0
        %506 = vmatmul.mubr.f32.gmra.mrb[0].mxu0 %v289
        %v507 = vpop.f32.mrb[0].mxu0
        %v508 = vadd.f32 0.0, %v507
        %v509 = vpop.f32.mrb[0].mxu0
        %510 = vmatprep.mubr.f32.mxu0 0.0
        %511 = vmatmul.mubr.f32.gmra.mrb[0].mxu0 %v290
        %v512 = vpop.f32.mrb[0].mxu0
        %v513 = vadd.f32 0.0, %v512
        %v514 = vpop.f32.mrb[0].mxu0
        %515 = vmatprep.mubr.f32.mxu0 0.0
        %516 = vmatmul.mubr.f32.gmra.mrb[0].mxu0 %v291
        %v517 = vpop.f32.mrb[0].mxu0
        %v518 = vadd.f32 0.0, %v517
        %v519 = vpop.f32.mrb[0].mxu0
        %520 = vmatprep.mubr.f32.mxu0 0.0
        %521 = vmatmul.mubr.f32.gmra.mrb[0].mxu0 %v292
        %v522 = vpop.f32.mrb[0].mxu0
        %v523 = vadd.f32 0.0, %v522
        %v524 = vpop.f32.mrb[0].mxu0
        %525 = vmatprep.mubr.f32.mxu0 0.0
        %526 = vmatmul.mubr.f32.gmra.mrb[0].mxu0 %v293
        %v527 = vpop.f32.mrb[0].mxu0
        %v528 = vadd.f32 0.0, %v527
        %v529 = vpop.f32.mrb[0].mxu0
        %530 = vmatprep.mubr.f32.mxu0 0.0
        %531 = vmatmul.mubr.f32.gmra.mrb[0].mxu0 %v294
        %v532 = vpop.f32.mrb[0].mxu0
        %v533 = vadd.f32 0.0, %v532
        %v534 = vpop.f32.mrb[0].mxu0
        %535 = vmatprep.mubr.f32.mxu0 0.0
        %536 = vmatmul.mubr.f32.gmra.mrb[0].mxu0 %v295
        %v537 = vpop.f32.mrb[0].mxu0
        %v538 = vadd.f32 0.0, %v537
        %v539 = vpop.f32.mrb[0].mxu0
        %540 = vmatprep.mubr.f32.mxu0 0.0
        %541 = vmatmul.mubr.f32.gmra.mrb[0].mxu0 %v296
        %v542 = vpop.f32.mrb[0].mxu0
        %v543 = vadd.f32 0.0, %v542
        %v544 = vpop.f32.mrb[0].mxu0
        %545 = vmatprep.mubr.f32.mxu0 0.0
        %546 = vmatmul.mubr.f32.gmra.mrb[0].mxu0 %v297
        %v547 = vpop.f32.mrb[0].mxu0
        %v548 = vadd.f32 0.0, %v547
        %v549 = vpop.f32.mrb[0].mxu0
        %550 = vmatprep.mubr.f32.mxu0 0.0
        %551 = vmatmul.mubr.f32.gmra.mrb[0].mxu0 %v298
        %v552 = vpop.f32.mrb[0].mxu0
        %v553 = vadd.f32 0.0, %v552
        %v554 = vpop.f32.mrb[0].mxu0
        %555 = vmatprep.mubr.f32.mxu0 0.0
        %556 = vmatmul.mubr.f32.gmra.mrb[0].mxu0 %v299
        %v557 = vpop.f32.mrb[0].mxu0
        %v558 = vadd.f32 0.0, %v557
        %v559 = vpop.f32.mrb[0].mxu0
        %560 = vmatprep.mubr.f32.mxu0 0.0
        %561 = vmatmul.mubr.f32.gmra.mrb[0].mxu0 %v300
        %v562 = vpop.f32.mrb[0].mxu0
        %v563 = vadd.f32 0.0, %v562
        %v564 = vpop.f32.mrb[0].mxu0
        %565 = vmatprep.mubr.f32.mxu0 0.0
        %566 = vmatmul.mubr.f32.gmra.mrb[0].mxu0 %v301
        %v567 = vpop.f32.mrb[0].mxu0
        %v568 = vadd.f32 0.0, %v567
        %v569 = vpop.f32.mrb[0].mxu0
        %570 = vmatprep.mubr.f32.mxu0 0.0
        %571 = vmatmul.mubr.f32.gmra.mrb[0].mxu0 %v302
        %v572 = vpop.f32.mrb[0].mxu0
        %v573 = vadd.f32 0.0, %v572
        %v574 = vpop.f32.mrb[0].mxu0
        %575 = vdwg.mxu0
        %v576 = vadd.f32 %v303, %v418
        %v577 = vadd.f32 %v304, %v423
        %v578 = vadd.f32 %v305, %v428
        %v579 = vadd.f32 %v306, %v433
        %v580 = vadd.f32 %v307, %v438
        %v581 = vadd.f32 %v308, %v443
        %v582 = vadd.f32 %v309, %v448
        %v583 = vadd.f32 %v310, %v453
        %v584 = vadd.f32 %v311, %v458
        %v585 = vadd.f32 %v312, %v463
        %v586 = vadd.f32 %v313, %v468
        %v587 = vadd.f32 %v314, %v473
        %v588 = vadd.f32 %v315, %v478
        %v589 = vadd.f32 %v316, %v483
        %v590 = vadd.f32 %v317, %v488
        %v591 = vadd.f32 %v318, %v493
        %v592 = vadd.f32 %v319, %v498
        %v593 = vadd.f32 %v320, %v503
        %v594 = vadd.f32 %v321, %v508
        %v595 = vadd.f32 %v322, %v513
        %v596 = vadd.f32 %v323, %v518
        %v597 = vadd.f32 %v324, %v523
        %v598 = vadd.f32 %v325, %v528
        %v599 = vadd.f32 %v326, %v533
        %v600 = vadd.f32 %v327, %v538
        %v601 = vadd.f32 %v328, %v543
        %v602 = vadd.f32 %v329, %v548
        %v603 = vadd.f32 %v330, %v553
        %v604 = vadd.f32 %v331, %v558
        %v605 = vadd.f32 %v332, %v563
        %v606 = vadd.f32 %v333, %v568
        %v607 = vadd.f32 %v334, %v573
        %608 = vst [vmem:[#allocation2] sm:$0xff] %v576
        %609 = vst [vmem:[#allocation2 + $0x8] sm:$0xff] %v577
        %610 = vst [vmem:[#allocation2 + $0x10] sm:$0xff] %v578
        %611 = vst [vmem:[#allocation2 + $0x18] sm:$0xff] %v579
        %612 = vst [vmem:[#allocation2 + $0x20] sm:$0xff] %v580
        %613 = vst [vmem:[#allocation2 + $0x28] sm:$0xff] %v581
        %614 = vst [vmem:[#allocation2 + $0x30] sm:$0xff] %v582
        %615 = vst [vmem:[#allocation2 + $0x38] sm:$0xff] %v583
        %616 = vst [vmem:[#allocation2 + $0x40] sm:$0xff] %v584
        %617 = vst [vmem:[#allocation2 + $0x48] sm:$0xff] %v585
        %618 = vst [vmem:[#allocation2 + $0x50] sm:$0xff] %v586
        %619 = vst [vmem:[#allocation2 + $0x58] sm:$0xff] %v587
        %620 = vst [vmem:[#allocation2 + $0x60] sm:$0xff] %v588
        %621 = vst [vmem:[#allocation2 + $0x68] sm:$0xff] %v589
        %622 = vst [vmem:[#allocation2 + $0x70] sm:$0xff] %v590
        %623 = vst [vmem:[#allocation2 + $0x78] sm:$0xff] %v591
        %624 = vst [vmem:[#allocation2 + $0x80] sm:$0xff] %v592
        %625 = vst [vmem:[#allocation2 + $0x88] sm:$0xff] %v593
        %626 = vst [vmem:[#allocation2 + $0x90] sm:$0xff] %v594
        %627 = vst [vmem:[#allocation2 + $0x98] sm:$0xff] %v595
        %628 = vst [vmem:[#allocation2 + $0xa0] sm:$0xff] %v596
        %629 = vst [vmem:[#allocation2 + $0xa8] sm:$0xff] %v597
        %630 = vst [vmem:[#allocation2 + $0xb0] sm:$0xff] %v598
        %631 = vst [vmem:[#allocation2 + $0xb8] sm:$0xff] %v599
        %632 = vst [vmem:[#allocation2 + $0xc0] sm:$0xff] %v600
        %633 = vst [vmem:[#allocation2 + $0xc8] sm:$0xff] %v601
        %634 = vst [vmem:[#allocation2 + $0xd0] sm:$0xff] %v602
        %635 = vst [vmem:[#allocation2 + $0xd8] sm:$0xff] %v603
        %636 = vst [vmem:[#allocation2 + $0xe0] sm:$0xff] %v604
        %637 = vst [vmem:[#allocation2 + $0xe8] sm:$0xff] %v605
        %638 = vst [vmem:[#allocation2 + $0xf0] sm:$0xff] %v606
        %639 = vst [vmem:[#allocation2 + $0xf8] sm:$0xff] %v607
        %v640 = vld [vmem:[#allocation2] sm:$0xff]
        %v641 = vld [vmem:[#allocation2 + $0x8] sm:$0xff]
        %v642 = vld [vmem:[#allocation2 + $0x10] sm:$0xff]
        %v643 = vld [vmem:[#allocation2 + $0x18] sm:$0xff]
        %v644 = vld [vmem:[#allocation2 + $0x20] sm:$0xff]
        %v645 = vld [vmem:[#allocation2 + $0x28] sm:$0xff]
        %v646 = vld [vmem:[#allocation2 + $0x30] sm:$0xff]
        %v647 = vld [vmem:[#allocation2 + $0x38] sm:$0xff]
        %v648 = vld [vmem:[#allocation2 + $0x40] sm:$0xff]
        %v649 = vld [vmem:[#allocation2 + $0x48] sm:$0xff]
        %v650 = vld [vmem:[#allocation2 + $0x50] sm:$0xff]
        %v651 = vld [vmem:[#allocation2 + $0x58] sm:$0xff]
        %v652 = vld [vmem:[#allocation2 + $0x60] sm:$0xff]
        %v653 = vld [vmem:[#allocation2 + $0x68] sm:$0xff]
        %v654 = vld [vmem:[#allocation2 + $0x70] sm:$0xff]
        %v655 = vld [vmem:[#allocation2 + $0x78] sm:$0xff]
        %v656 = vld [vmem:[#allocation2 + $0x80] sm:$0xff]
        %v657 = vld [vmem:[#allocation2 + $0x88] sm:$0xff]
        %v658 = vld [vmem:[#allocation2 + $0x90] sm:$0xff]
        %v659 = vld [vmem:[#allocation2 + $0x98] sm:$0xff]
        %v660 = vld [vmem:[#allocation2 + $0xa0] sm:$0xff]
        %v661 = vld [vmem:[#allocation2 + $0xa8] sm:$0xff]
        %v662 = vld [vmem:[#allocation2 + $0xb0] sm:$0xff]
        %v663 = vld [vmem:[#allocation2 + $0xb8] sm:$0xff]
        %v664 = vld [vmem:[#allocation2 + $0xc0] sm:$0xff]
        %v665 = vld [vmem:[#allocation2 + $0xc8] sm:$0xff]
        %v666 = vld [vmem:[#allocation2 + $0xd0] sm:$0xff]
        %v667 = vld [vmem:[#allocation2 + $0xd8] sm:$0xff]
        %v668 = vld [vmem:[#allocation2 + $0xe0] sm:$0xff]
        %v669 = vld [vmem:[#allocation2 + $0xe8] sm:$0xff]
        %v670 = vld [vmem:[#allocation2 + $0xf0] sm:$0xff]
        %v671 = vld [vmem:[#allocation2 + $0xf8] sm:$0xff]
        %v672 = vld [vmem:[%s238] sm:$0x1]
        %v674 = vlaneseq
        %v675 = vshrl.u32 %v674, 7
        %v676 = vsub.s32 0, %v675
        %v677 = vrot.slane %v672, %v676
        %v679 = vadd.f32 %v640, %v677
        %v680 = vadd.f32 %v641, %v677
        %v681 = vadd.f32 %v642, %v677
        %v682 = vadd.f32 %v643, %v677
        %v683 = vadd.f32 %v644, %v677
        %v684 = vadd.f32 %v645, %v677
        %v685 = vadd.f32 %v646, %v677
        %v686 = vadd.f32 %v647, %v677
        %v687 = vadd.f32 %v648, %v677
        %v688 = vadd.f32 %v649, %v677
        %v689 = vadd.f32 %v650, %v677
        %v690 = vadd.f32 %v651, %v677
        %v691 = vadd.f32 %v652, %v677
        %v692 = vadd.f32 %v653, %v677
        %v693 = vadd.f32 %v654, %v677
        %v694 = vadd.f32 %v655, %v677
        %v695 = vadd.f32 %v656, %v677
        %v696 = vadd.f32 %v657, %v677
        %v697 = vadd.f32 %v658, %v677
        %v698 = vadd.f32 %v659, %v677
        %v699 = vadd.f32 %v660, %v677
        %v700 = vadd.f32 %v661, %v677
        %v701 = vadd.f32 %v662, %v677
        %v702 = vadd.f32 %v663, %v677
        %v703 = vadd.f32 %v664, %v677
        %v704 = vadd.f32 %v665, %v677
        %v705 = vadd.f32 %v666, %v677
        %v706 = vadd.f32 %v667, %v677
        %v707 = vadd.f32 %v668, %v677
        %v708 = vadd.f32 %v669, %v677
        %v709 = vadd.f32 %v670, %v677
        %v710 = vadd.f32 %v671, %v677
        %vm711 = vcmp.ge.f32.partialorder %v679, 0.0
        %vm712 = vcmp.ge.f32.partialorder %v680, 0.0
        %vm713 = vcmp.ge.f32.partialorder %v681, 0.0
        %vm714 = vcmp.ge.f32.partialorder %v682, 0.0
        %vm715 = vcmp.ge.f32.partialorder %v683, 0.0
        %vm716 = vcmp.ge.f32.partialorder %v684, 0.0
        %vm717 = vcmp.ge.f32.partialorder %v685, 0.0
        %vm718 = vcmp.ge.f32.partialorder %v686, 0.0
        %vm719 = vcmp.ge.f32.partialorder %v687, 0.0
        %vm720 = vcmp.ge.f32.partialorder %v688, 0.0
        %vm721 = vcmp.ge.f32.partialorder %v689, 0.0
        %vm722 = vcmp.ge.f32.partialorder %v690, 0.0
        %vm723 = vcmp.ge.f32.partialorder %v691, 0.0
        %vm724 = vcmp.ge.f32.partialorder %v692, 0.0
        %vm725 = vcmp.ge.f32.partialorder %v693, 0.0
        %vm726 = vcmp.ge.f32.partialorder %v694, 0.0
        %vm727 = vcmp.ge.f32.partialorder %v695, 0.0
        %vm728 = vcmp.ge.f32.partialorder %v696, 0.0
        %vm729 = vcmp.ge.f32.partialorder %v697, 0.0
        %vm730 = vcmp.ge.f32.partialorder %v698, 0.0
        %vm731 = vcmp.ge.f32.partialorder %v699, 0.0
        %vm732 = vcmp.ge.f32.partialorder %v700, 0.0
        %vm733 = vcmp.ge.f32.partialorder %v701, 0.0
        %vm734 = vcmp.ge.f32.partialorder %v702, 0.0
        %vm735 = vcmp.ge.f32.partialorder %v703, 0.0
        %vm736 = vcmp.ge.f32.partialorder %v704, 0.0
        %vm737 = vcmp.ge.f32.partialorder %v705, 0.0
        %vm738 = vcmp.ge.f32.partialorder %v706, 0.0
        %vm739 = vcmp.ge.f32.partialorder %v707, 0.0
        %vm740 = vcmp.ge.f32.partialorder %v708, 0.0
        %vm741 = vcmp.ge.f32.partialorder %v709, 0.0
        %vm742 = vcmp.ge.f32.partialorder %v710, 0.0
        %v743 = vmul.f32 %v679, 0.2
        %v744 = vmul.f32 %v680, 0.2
        %v745 = vmul.f32 %v681, 0.2
        %v746 = vmul.f32 %v682, 0.2
        %v747 = vmul.f32 %v683, 0.2
        %v748 = vmul.f32 %v684, 0.2
        %v749 = vmul.f32 %v685, 0.2
        %v750 = vmul.f32 %v686, 0.2
        %v751 = vmul.f32 %v687, 0.2
        %v752 = vmul.f32 %v688, 0.2
        %v753 = vmul.f32 %v689, 0.2
        %v754 = vmul.f32 %v690, 0.2
        %v755 = vmul.f32 %v691, 0.2
        %v756 = vmul.f32 %v692, 0.2
        %v757 = vmul.f32 %v693, 0.2
        %v758 = vmul.f32 %v694, 0.2
        %v759 = vmul.f32 %v695, 0.2
        %v760 = vmul.f32 %v696, 0.2
        %v761 = vmul.f32 %v697, 0.2
        %v762 = vmul.f32 %v698, 0.2
        %v763 = vmul.f32 %v699, 0.2
        %v764 = vmul.f32 %v700, 0.2
        %v765 = vmul.f32 %v701, 0.2
        %v766 = vmul.f32 %v702, 0.2
        %v767 = vmul.f32 %v703, 0.2
        %v768 = vmul.f32 %v704, 0.2
        %v769 = vmul.f32 %v705, 0.2
        %v770 = vmul.f32 %v706, 0.2
        %v771 = vmul.f32 %v707, 0.2
        %v772 = vmul.f32 %v708, 0.2
        %v773 = vmul.f32 %v709, 0.2
        %v774 = vmul.f32 %v710, 0.2
        %v775 = vsel %vm711, %v679, %v743
        %v776 = vsel %vm712, %v680, %v744
        %v777 = vsel %vm713, %v681, %v745
        %v778 = vsel %vm714, %v682, %v746
        %v779 = vsel %vm715, %v683, %v747
        %v780 = vsel %vm716, %v684, %v748
        %v781 = vsel %vm717, %v685, %v749
        %v782 = vsel %vm718, %v686, %v750
        %v783 = vsel %vm719, %v687, %v751
        %v784 = vsel %vm720, %v688, %v752
        %v785 = vsel %vm721, %v689, %v753
        %v786 = vsel %vm722, %v690, %v754
        %v787 = vsel %vm723, %v691, %v755
        %v788 = vsel %vm724, %v692, %v756
        %v789 = vsel %vm725, %v693, %v757
        %v790 = vsel %vm726, %v694, %v758
        %v791 = vsel %vm727, %v695, %v759
        %v792 = vsel %vm728, %v696, %v760
        %v793 = vsel %vm729, %v697, %v761
        %v794 = vsel %vm730, %v698, %v762
        %v795 = vsel %vm731, %v699, %v763
        %v796 = vsel %vm732, %v700, %v764
        %v797 = vsel %vm733, %v701, %v765
        %v798 = vsel %vm734, %v702, %v766
        %v799 = vsel %vm735, %v703, %v767
        %v800 = vsel %vm736, %v704, %v768
        %v801 = vsel %vm737, %v705, %v769
        %v802 = vsel %vm738, %v706, %v770
        %v803 = vsel %vm739, %v707, %v771
        %v804 = vsel %vm740, %v708, %v772
        %v805 = vsel %vm741, %v709, %v773
        %v806 = vsel %vm742, %v710, %v774
        %807 = vst [vmem:[%s235] sm:$0xff] %v775
        %808 = vst [vmem:[%s235 + $0x8] sm:$0xff] %v776
        %809 = vst [vmem:[%s235 + $0x10] sm:$0xff] %v777
        %810 = vst [vmem:[%s235 + $0x18] sm:$0xff] %v778
        %811 = vst [vmem:[%s235 + $0x20] sm:$0xff] %v779
        %812 = vst [vmem:[%s235 + $0x28] sm:$0xff] %v780
        %813 = vst [vmem:[%s235 + $0x30] sm:$0xff] %v781
        %814 = vst [vmem:[%s235 + $0x38] sm:$0xff] %v782
        %815 = vst [vmem:[%s235 + $0x40] sm:$0xff] %v783
        %816 = vst [vmem:[%s235 + $0x48] sm:$0xff] %v784
        %817 = vst [vmem:[%s235 + $0x50] sm:$0xff] %v785
        %818 = vst [vmem:[%s235 + $0x58] sm:$0xff] %v786
        %819 = vst [vmem:[%s235 + $0x60] sm:$0xff] %v787
        %820 = vst [vmem:[%s235 + $0x68] sm:$0xff] %v788
        %821 = vst [vmem:[%s235 + $0x70] sm:$0xff] %v789
        %822 = vst [vmem:[%s235 + $0x78] sm:$0xff] %v790
        %823 = vst [vmem:[%s235 + $0x80] sm:$0xff] %v791
        %824 = vst [vmem:[%s235 + $0x88] sm:$0xff] %v792
        %825 = vst [vmem:[%s235 + $0x90] sm:$0xff] %v793
        %826 = vst [vmem:[%s235 + $0x98] sm:$0xff] %v794
        %827 = vst [vmem:[%s235 + $0xa0] sm:$0xff] %v795
        %828 = vst [vmem:[%s235 + $0xa8] sm:$0xff] %v796
        %829 = vst [vmem:[%s235 + $0xb0] sm:$0xff] %v797
        %830 = vst [vmem:[%s235 + $0xb8] sm:$0xff] %v798
        %831 = vst [vmem:[%s235 + $0xc0] sm:$0xff] %v799
        %832 = vst [vmem:[%s235 + $0xc8] sm:$0xff] %v800
        %833 = vst [vmem:[%s235 + $0xd0] sm:$0xff] %v801
        %834 = vst [vmem:[%s235 + $0xd8] sm:$0xff] %v802
        %835 = vst [vmem:[%s235 + $0xe0] sm:$0xff] %v803
        %836 = vst [vmem:[%s235 + $0xe8] sm:$0xff] %v804
        %837 = vst [vmem:[%s235 + $0xf0] sm:$0xff] %v805
        %838 = vst [vmem:[%s235 + $0xf8] sm:$0xff] %v806
        %s839 = sand.u32 %s121, 1
        %s840 = scalar_lea.sflag [#allocation5], %s839
        %s841 = sand.u32 %s121, 1
        %s842 = smul.addr %s841, 256
        %s843 = scalar_lea.vmem [#allocation8], %s842
        // Predicated region
        $region41: #{tpu_custom_call.1} parent=31 // pred_check
          %p844 = pneg %p131
        $region42: #{tpu_custom_call.1} parent=31 // pred_check_branch
          %846 = sbr.rel (%p844) target = $region44
        $region43: #{tpu_custom_call.1} parent=31 // pred_region
          %s848 = ssub.s32 4096, 4096
          %849 = vsyncadd %s840, %s848
          %s850 = smul.addr %s25, 32
          %s851 = sadd.s32 %s26, %s850
          %s852 = smul.addr %s851, 128
          %s853 = scalar_lea.hbm %s3, %s852
          %s854 = sshll.u32 %s843, 4
          %s855 = int_to_ptr.vmem [resolvable:$true] %s854
          %860 = dma.vmem_to_hbm [thread:$0]  %s855, 4096, %s853, %s840, 128, 128, 8
        $region44: #{tpu_custom_call.1} parent=31 // pred_fallthru
          _
      $region32: #{tpu_custom_call.1} parent=5 // pred_fallthru
        _
      %p861 = scmp.le.s32.totalorder 2, %s16
      // Predicated region
      $region45: #{tpu_custom_call.1} parent=5 // pred_check
        %p862 = pneg %p861
      $region46: #{tpu_custom_call.1} parent=5 // pred_check_branch
        %864 = sbr.rel (%p862) target = $region48
      $region47: #{tpu_custom_call.1} parent=5 // pred_region
        %s865 = ssub.s32 %s16, 2
        // Predicated region
        $region49: #{tpu_custom_call.1} parent=47 // pred_check
          %p866 = pneg %p137
        $region50: #{tpu_custom_call.1} parent=47 // pred_check_branch
          %868 = sbr.rel (%p866) target = $region52
        $region51: #{tpu_custom_call.1} parent=47 // pred_region
          %s869 = sand.u32 %s122, 1
          %s870 = scalar_lea.sflag [#allocation5], %s869
          %s871 = sand.u32 %s122, 1
          %s872 = smul.addr %s871, 256
          %s873 = scalar_lea.vmem [#allocation8], %s872
          %874 = dma.done %s870, 4096
        $region52: #{tpu_custom_call.1} parent=47 // pred_fallthru
          _
      $region48: #{tpu_custom_call.1} parent=5 // pred_fallthru
        _
    $region6: #{tpu_custom_call.1} parent=1 // loop_footer
      %s20 = sadd.s32 1, %s16
    $region7: #{tpu_custom_call.1} parent=1 // loop_footer_branch
      %15 = sbr.rel target = $region3
    $region8: #{tpu_custom_call.1} parent=1 // loop_exit
      _
    %875 = vsyncpa [#allocation4], 1
    %s876 = scalar_lea.sflag [#allocation4], 1
    %877 = vsyncpa %s876, 1
    %878 = vsyncpa [#allocation7], 1
    %879 = vsyncpa [#allocation5], 1
    %s880 = scalar_lea.sflag [#allocation5], 1
    %881 = vsyncpa %s880, 1

</llo_original>
